<compile_context>
chip_gen: v5e
topology: v5e:2x2
jax: 0.10.0
libtpu: 0.0.40
codegen_flags: <defaults>
</compile_context>

<pallas_src>
from functools import partial

import jax
import jax.numpy as jnp
from jax.experimental import pallas as pl
from jax.experimental.pallas import tpu as pltpu


def _add_updown_kernel(x_ref, frames_ref, w_ref, b_ref, o_ref, *, p_ex, t_tile):
    """One (batch, time-tile) grid step.

    x_ref      : (1, C, Tt)  delayed main branch
    frames_ref : (1, Tt, 2K) conv input frames (delay already absorbed in padding)
    w_ref      : (C, 2K)     conv weight
    b_ref      : (C, 1)      conv bias
    o_ref      : (1, C, Tt)  delayed_x + delayed_ex
    """
    frames = frames_ref[0]                     # (Tt, 2K)
    w = w_ref[...]                             # (C, 2K)

    # Strided causal conv == contraction over the 2K taps; result is lane-dense (C, Tt).
    ex_down = jax.lax.dot_general(
        w, frames,
        dimension_numbers=(((1,), (1,)), ((), ())),
        preferred_element_type=jnp.float32,
    )                                          # (C, Tt)

    if p_ex > 0:
        # First p_ex output frames of the delayed ex branch are exactly zero (no bias).
        t0 = pl.program_id(1) * t_tile
        t_idx = jax.lax.broadcasted_iota(jnp.int32, (1, t_tile), 1) + t0
        bias_term = b_ref[...] * (t_idx >= p_ex).astype(jnp.float32)   # (C, Tt)
    else:
        bias_term = b_ref[...]                                         # (C, 1)

    o_ref[0] = x_ref[0] + ex_down + bias_term


def add_updown_sampling(x, ex, weight, bias, *, kernel_size, net_delay):
    """JAX/Pallas equivalent of AddUpDownSampling.forward(x, ex).

    x      : (B, C, T)        main branch (latent rate)
    ex     : (B, 1, T*K)      excitation (audio rate), K = kernel_size = conv stride
    weight : (C, 1, 2K)       ex_conv weight
    bias   : (C,)             ex_conv bias
    Returns (B, C, T).
    """
    x = x.astype(jnp.float32)
    ex = ex.astype(jnp.float32)
    B, C, T = x.shape
    K = int(kernel_size)
    kw = 2 * K
    assert ex.shape == (B, 1, T * K), "ex must be (B, 1, T*kernel_size)"

    p_conv = kw - 1                 # causal 'same' left padding for kernel 2K
    sine_delay = 0                  # causal conv: zero future compensation (see TODO above)
    max_delay = max(int(net_delay), sine_delay)
    p_x = max_delay - int(net_delay)
    p_ex = max_delay - sine_delay

    # --- glue (plain JAX, cheap) ---------------------------------------------
    # Main branch delay (no-op for p_x == 0, which is the common causal case).
    if p_x > 0:
        x_d = jnp.concatenate(
            [jnp.zeros((B, C, p_x), jnp.float32), x[..., : T - p_x]], axis=-1)
    else:
        x_d = x

    # Conv frames: absorb the ex-branch delay into extra left zero padding.
    e = ex[:, 0, :]                                                    # (B, T*K)
    e_pad = jnp.pad(e, ((0, 0), (p_conv + p_ex * K, 0)))[:, : (T + 1) * K]
    chunks = e_pad.reshape(B, T + 1, K)
    frames = jnp.concatenate([chunks[:, :T, :], chunks[:, 1:, :]], axis=-1)  # (B, T, 2K)

    w = weight.reshape(C, kw).astype(jnp.float32)
    b = bias.reshape(C, 1).astype(jnp.float32)

    # --- fused hot path in Pallas --------------------------------------------
    # Time tiling: largest 128-multiple tile dividing T, else the full (small) T.
    t_tile = T
    for cand in (2048, 1024, 512, 256, 128):
        if T % cand == 0:
            t_tile = cand
            break
    n_t = T // t_tile

    kernel = partial(_add_updown_kernel, p_ex=p_ex, t_tile=t_tile)
    out = pl.pallas_call(
        kernel,
        out_shape=jax.ShapeDtypeStruct((B, C, T), jnp.float32),
        grid_spec=pltpu.PrefetchScalarGridSpec(
            num_scalar_prefetch=0,
            grid=(B, n_t),
            in_specs=[
                pl.BlockSpec((1, C, t_tile), lambda bi, ti: (bi, 0, ti)),
                pl.BlockSpec((1, t_tile, kw), lambda bi, ti: (bi, ti, 0)),
                pl.BlockSpec((C, kw), lambda bi, ti: (0, 0)),
                pl.BlockSpec((C, 1), lambda bi, ti: (0, 0)),
            ],
            out_specs=pl.BlockSpec((1, C, t_tile), lambda bi, ti: (bi, 0, ti)),
        ),
        compiler_params=pltpu.CompilerParams(
            dimension_semantics=("parallel", "parallel")),
    )(x_d, frames, w, b)
    return out


def _reference(x, ex, weight, bias, K, net_delay):
    """Pure-JAX reference mirroring the PyTorch forward."""
    B, C, T = x.shape
    p_conv = 2 * K - 1
    ex_down = jax.lax.conv_general_dilated(
        ex, weight, window_strides=(K,), padding=[(p_conv, 0)],
        dimension_numbers=("NCH", "OIH", "NCH"))[..., :T]
    ex_down = ex_down + bias[None, :, None]

    sine_delay = 0
    max_delay = max(int(net_delay), sine_delay)
    p_x = max_delay - int(net_delay)
    p_ex = max_delay - sine_delay

    def delay(sig, p):
        if p == 0:
            return sig
        pad = jnp.zeros(sig.shape[:-1] + (p,), sig.dtype)
        return jnp.concatenate([pad, sig[..., :-p]], axis=-1)

    return delay(x, p_x) + delay(ex_down, p_ex)


if __name__ == "__main__":
    B, C, T = 2, 4, 16          # batch, channels, latent frames
    K = 4                       # kernel_size (== conv stride); conv kernel = 2K = 8
    net_delay = 2

    key = jax.random.PRNGKey(0)
    kx, ke, kw_, kb = jax.random.split(key, 4)
    x = jax.random.normal(kx, (B, C, T), dtype=jnp.float32)
    ex = jax.random.normal(ke, (B, 1, T * K), dtype=jnp.float32)
    weight = 0.1 * jax.random.normal(kw_, (C, 1, 2 * K), dtype=jnp.float32)
    bias = 0.1 * jax.random.normal(kb, (C,), dtype=jnp.float32)

    out = add_updown_sampling(x, ex, weight, bias, kernel_size=K, net_delay=net_delay)
    out = jax.block_until_ready(out)

    ref = _reference(x, ex, weight, bias, K, net_delay)
    assert out.shape == (B, C, T)
    assert jnp.allclose(out, ref, atol=1e-5, rtol=1e-5), "mismatch vs reference"

    print("KERNEL_OK")
</pallas_src>

<mosaic_0001>
module attributes {stable_mosaic.version = 11 : i64} {
  func.func @_add_updown_kernel(%arg0: i32, %arg1: i32, %arg2: memref<1x4x16xf32, #tpu.memory_space<vmem>>, %arg3: memref<1x16x8xf32, #tpu.memory_space<vmem>>, %arg4: memref<4x8xf32, #tpu.memory_space<vmem>>, %arg5: memref<4x1xf32, #tpu.memory_space<vmem>>, %arg6: memref<1x4x16xf32, #tpu.memory_space<vmem>>) attributes {dimension_semantics = [#tpu.dimension_semantics<parallel>, #tpu.dimension_semantics<parallel>], iteration_bounds = array<i64: 2, 1>, scalar_prefetch = 0 : i64, scratch_operands = 0 : i64, tpu.core_type = #tpu.core_type<tc>, window_params = [{transform_indices = @transform_0, window_bounds = array<i64: 1, 4, 16>}, {transform_indices = @transform_1, window_bounds = array<i64: 1, 16, 8>}, {pipeline_mode = #tpu.pipeline_mode<synchronous>, transform_indices = @transform_2, window_bounds = array<i64: 4, 8>}, {pipeline_mode = #tpu.pipeline_mode<synchronous>, transform_indices = @transform_3, window_bounds = array<i64: 4, 1>}, {transform_indices = @transform_4, window_bounds = array<i64: 1, 4, 16>}]} {
    %c0 = arith.constant 0 : index
    %c0_0 = arith.constant 0 : index
    %c0_1 = arith.constant 0 : index
    %0 = vector.load %arg3[%c0, %c0_0, %c0_1] : memref<1x16x8xf32, #tpu.memory_space<vmem>>, vector<1x16x8xf32>
    %1 = vector.shape_cast %0 : vector<1x16x8xf32> to vector<16x8xf32>
    %c0_2 = arith.constant 0 : index
    %c0_3 = arith.constant 0 : index
    %2 = vector.load %arg4[%c0_2, %c0_3] : memref<4x8xf32, #tpu.memory_space<vmem>>, vector<4x8xf32>
    %cst = arith.constant dense<0.000000e+00> : vector<4x16xf32>
    %3 = tpu.matmul %2, %1, %cst {dimension_numbers = #tpu.dot_dimension_numbers<[1], [1], [0], [0], [0, 0, 1, 0], [], []>} : vector<4x8xf32>, vector<16x8xf32>, vector<4x16xf32> -> vector<4x16xf32>
    %c16_i32 = arith.constant 16 : i32
    %4 = arith.muli %arg1, %c16_i32 : i32
    %5 = tpu.iota {dimensions = array<i32: 1>} : vector<1x16xi32>
    %6 = vector.broadcast %4 : i32 to vector<1x16xi32>
    %7 = arith.addi %5, %6 : vector<1x16xi32>
    %c0_4 = arith.constant 0 : index
    %c0_5 = arith.constant 0 : index
    %8 = vector.load %arg5[%c0_4, %c0_5] : memref<4x1xf32, #tpu.memory_space<vmem>>, vector<4x1xf32>
    %c2_i32 = arith.constant 2 : i32
    %9 = vector.broadcast %c2_i32 : i32 to vector<1x16xi32>
    %10 = arith.cmpi sge, %7, %9 : vector<1x16xi32>
    %11 = arith.extui %10 : vector<1x16xi1> to vector<1x16xi32>
    %12 = arith.sitofp %11 : vector<1x16xi32> to vector<1x16xf32>
    %13 = vector.broadcast %8 : vector<4x1xf32> to vector<4x16xf32>
    %14 = vector.broadcast %12 : vector<1x16xf32> to vector<4x16xf32>
    %15 = arith.mulf %13, %14 : vector<4x16xf32>
    %c0_6 = arith.constant 0 : index
    %c0_7 = arith.constant 0 : index
    %c0_8 = arith.constant 0 : index
    %16 = vector.load %arg2[%c0_6, %c0_7, %c0_8] : memref<1x4x16xf32, #tpu.memory_space<vmem>>, vector<1x4x16xf32>
    %17 = vector.shape_cast %16 : vector<1x4x16xf32> to vector<4x16xf32>
    %18 = arith.addf %17, %3 : vector<4x16xf32>
    %19 = arith.addf %18, %15 : vector<4x16xf32>
    %c0_9 = arith.constant 0 : index
    %c0_10 = arith.constant 0 : index
    %c0_11 = arith.constant 0 : index
    %20 = vector.load %arg6[%c0_9, %c0_10, %c0_11] : memref<1x4x16xf32, #tpu.memory_space<vmem>>, vector<1x4x16xf32>
    %21 = vector.shape_cast %20 : vector<1x4x16xf32> to vector<4x16xf32>
    %22 = vector.shape_cast %19 : vector<4x16xf32> to vector<1x4x16xf32>
    tpu.vector_store %arg6[%c0_9, %c0_10, %c0_11], %22 {strides = array<i32>} : memref<1x4x16xf32, #tpu.memory_space<vmem>>, vector<1x4x16xf32>,
    return
  }
  func.func @transform_0(%arg0: i32, %arg1: i32) -> (i32, i32, i32) {
    %c0_i32 = arith.constant 0 : i32
    %c0_i32_0 = arith.constant 0 : i32
    return %arg0, %c0_i32, %arg1 : i32, i32, i32
  }
  func.func @transform_1(%arg0: i32, %arg1: i32) -> (i32, i32, i32) {
    %c0_i32 = arith.constant 0 : i32
    %c0_i32_0 = arith.constant 0 : i32
    return %arg0, %arg1, %c0_i32 : i32, i32, i32
  }
  func.func @transform_2(%arg0: i32, %arg1: i32) -> (i32, i32) {
    %c0_i32 = arith.constant 0 : i32
    %c0_i32_0 = arith.constant 0 : i32
    %c0_i32_1 = arith.constant 0 : i32
    return %c0_i32, %c0_i32_0 : i32, i32
  }
  func.func @transform_3(%arg0: i32, %arg1: i32) -> (i32, i32) {
    %c0_i32 = arith.constant 0 : i32
    %c0_i32_0 = arith.constant 0 : i32
    %c0_i32_1 = arith.constant 0 : i32
    return %c0_i32, %c0_i32_0 : i32, i32
  }
  func.func @transform_4(%arg0: i32, %arg1: i32) -> (i32, i32, i32) {
    %c0_i32 = arith.constant 0 : i32
    %c0_i32_0 = arith.constant 0 : i32
    return %arg0, %c0_i32, %arg1 : i32, i32, i32
  }
}

</mosaic_0001>

<llo_original>
// kernel: tpu_custom_call.1
$region0: #{tpu_custom_call.1}
  #allocation0 [shape = 'u32[]', space=smem, size = 0x4, offset = 0x4, fixed_abs, tag = 'smem constant byte address 0x4 - core index']
  #allocation1 [shape = 'u32[72,128]{1,0:T(1,128)}', space=vmem, size = 0x9000, scoped, tag = 'internal scratch']
  %s0 = inlined_call_operand.vmem [shape: f32[2,4,16], index: 0, kind: input, shape index: {}]
  %s1 = inlined_call_operand.vmem [shape: f32[2,16,8], index: 1, kind: input, shape index: {}]
  %s2 = inlined_call_operand.vmem [shape: f32[4,8], index: 2, kind: input, shape index: {}]
  %s3 = inlined_call_operand.vmem [shape: f32[4,1], index: 3, kind: input, shape index: {}]
  %s4 = inlined_call_operand.hbm [shape: f32[2,4,16], index: 4, kind: output, shape index: {}]
  %s5 = sld [smem:[#allocation0]]
  $region49: #{tpu_custom_call.1} parent=0
    _
  %s7 = ssub.s32 1, %s5
  %s8 = scalar_select 0, %s7, %s5
  $region1: #{tpu_custom_call.1} parent=0
    #allocation2 [shape = 'u8[4096]{0}', space=vmem, size = 0x1000, scoped, tag = 'output window, operand 0']
    #allocation3 [shape = 's32[2]{0}', space=sflag, size = 0x8, scoped, tag = 'scoped memory for tpu_custom_call.1']
    %9 = vsyncpa [#allocation3], 0
    %s10 = scalar_lea.sflag [#allocation3], 1
    %11 = vsyncpa %s10, 0
    loop: start=0, step=1, limit=4
    $region2: #{tpu_custom_call.1} parent=1 // loop_pre_header
      _
    $region3: #{tpu_custom_call.1} parent=1 // loop_header
      %s13 = sphi 0, %s17
      %p14 = scmp.ge.s32.totalorder %s13, 4
      %s20 = sphi 0, %s32
      %s21 = sphi 0, %s28
      %s22 = sphi 0, %s20
      %s23 = sphi 0, %s21
      %s24 = sphi 0, %s22
      %s25 = sphi 0, %s23
      %s37 = sphi 0, %s39
      %s40 = sphi 0, %s37
      %s41 = sphi 0, %s40
      %s57 = sphi 0, %s41
      %s65 = sphi 0, %s67
      %s68 = sphi 0, %s65
      %s69 = sphi 0, %s68
      %s85 = sphi 0, %s69
      %s89 = sphi 0, %s89
      %s91 = sphi 0, %s89
      %s92 = sphi 0, %s91
      %s106 = sphi 0, %s92
      %s110 = sphi 0, %s110
      %s112 = sphi 0, %s110
      %s113 = sphi 0, %s112
      %s127 = sphi 0, %s113
      %s135 = sphi 0, %s137
      %s138 = sphi 0, %s135
      %s139 = sphi 0, %s138
      %s155 = sphi 0, %s139
    $region4: #{tpu_custom_call.1} parent=1 // loop_header_branch
      %16 = sbr.rel (%p14) target = $region8
    $region5: #{tpu_custom_call.1} parent=1 // loop_body
      %s18 = ssub.s32 %s13, 1
      %s19 = ssub.s32 %s13, 2
      %s26 = sadd.s32 1, %s21
      %p27 = scmp.ge.s32.totalorder %s26, 1
      %s28 = scalar_select %p27, 0, %s26
      %s29 = sadd.s32 1, %s20
      %s30 = scalar_select %p27, %s29, %s20
      %p31 = scmp.ge.s32.totalorder %s30, 2
      %s32 = scalar_select %p31, 0, %s30
      %s33 = ssub.s32 %s20, %s32
      %s34 = ssub.s32 %s21, %s28
      %s35 = sor.u32 %s33, %s34
      %p36 = scmp.eq.s32.totalorder %s35, 0
      %s38 = sadd.s32 %s37, 1
      %s39 = scalar_select %p36, %s37, %s38
      %p42 = pneg %p36
      %p43 = scmp.eq.s32.totalorder %s13, 1
      %p44 = por %p42, %p43
      %p45 = scmp.ne.s32.totalorder %s37, %s40
      %p46 = scmp.eq.s32.totalorder %s13, 0
      %p47 = por %p45, %p46
      %p48 = scmp.ne.s32.totalorder %s37, %s40
      %p49 = scmp.eq.s32.totalorder %s18, 1
      %p50 = por %p48, %p49
      %p51 = scmp.ne.s32.totalorder %s40, %s41
      %p52 = scmp.eq.s32.totalorder %s18, 0
      %p53 = por %p51, %p52
      %p54 = scmp.ne.s32.totalorder %s40, %s41
      %p55 = scmp.eq.s32.totalorder %s19, 1
      %p56 = por %p54, %p55
      %p58 = scmp.ne.s32.totalorder %s41, %s57
      %p59 = scmp.eq.s32.totalorder %s19, 0
      %p60 = por %p58, %p59
      %s61 = ssub.s32 %s20, %s32
      %s62 = ssub.s32 %s21, %s28
      %s63 = sor.u32 %s61, %s62
      %p64 = scmp.eq.s32.totalorder %s63, 0
      %s66 = sadd.s32 %s65, 1
      %s67 = scalar_select %p64, %s65, %s66
      %p70 = pneg %p64
      %p71 = scmp.eq.s32.totalorder %s13, 1
      %p72 = por %p70, %p71
      %p73 = scmp.ne.s32.totalorder %s65, %s68
      %p74 = scmp.eq.s32.totalorder %s13, 0
      %p75 = por %p73, %p74
      %p76 = scmp.ne.s32.totalorder %s65, %s68
      %p77 = scmp.eq.s32.totalorder %s18, 1
      %p78 = por %p76, %p77
      %p79 = scmp.ne.s32.totalorder %s68, %s69
      %p80 = scmp.eq.s32.totalorder %s18, 0
      %p81 = por %p79, %p80
      %p82 = scmp.ne.s32.totalorder %s68, %s69
      %p83 = scmp.eq.s32.totalorder %s19, 1
      %p84 = por %p82, %p83
      %p86 = scmp.ne.s32.totalorder %s69, %s85
      %p87 = scmp.eq.s32.totalorder %s19, 0
      %p88 = por %p86, %p87
      %s90 = sadd.s32 %s89, 1
      %p93 = scmp.eq.s32.totalorder %s13, 1
      %p94 = scmp.ne.s32.totalorder %s89, %s91
      %p95 = scmp.eq.s32.totalorder %s13, 0
      %p96 = por %p94, %p95
      %p97 = scmp.ne.s32.totalorder %s89, %s91
      %p98 = scmp.eq.s32.totalorder %s18, 1
      %p99 = por %p97, %p98
      %p100 = scmp.ne.s32.totalorder %s91, %s92
      %p101 = scmp.eq.s32.totalorder %s18, 0
      %p102 = por %p100, %p101
      %p103 = scmp.ne.s32.totalorder %s91, %s92
      %p104 = scmp.eq.s32.totalorder %s19, 1
      %p105 = por %p103, %p104
      %p107 = scmp.ne.s32.totalorder %s92, %s106
      %p108 = scmp.eq.s32.totalorder %s19, 0
      %p109 = por %p107, %p108
      %s111 = sadd.s32 %s110, 1
      %p114 = scmp.eq.s32.totalorder %s13, 1
      %p115 = scmp.ne.s32.totalorder %s110, %s112
      %p116 = scmp.eq.s32.totalorder %s13, 0
      %p117 = por %p115, %p116
      %p118 = scmp.ne.s32.totalorder %s110, %s112
      %p119 = scmp.eq.s32.totalorder %s18, 1
      %p120 = por %p118, %p119
      %p121 = scmp.ne.s32.totalorder %s112, %s113
      %p122 = scmp.eq.s32.totalorder %s18, 0
      %p123 = por %p121, %p122
      %p124 = scmp.ne.s32.totalorder %s112, %s113
      %p125 = scmp.eq.s32.totalorder %s19, 1
      %p126 = por %p124, %p125
      %p128 = scmp.ne.s32.totalorder %s113, %s127
      %p129 = scmp.eq.s32.totalorder %s19, 0
      %p130 = por %p128, %p129
      %s131 = ssub.s32 %s20, %s32
      %s132 = ssub.s32 %s21, %s28
      %s133 = sor.u32 %s131, %s132
      %p134 = scmp.eq.s32.totalorder %s133, 0
      %s136 = sadd.s32 %s135, 1
      %s137 = scalar_select %p134, %s135, %s136
      %p140 = pneg %p134
      %p141 = scmp.eq.s32.totalorder %s13, 1
      %p142 = por %p140, %p141
      %p143 = scmp.ne.s32.totalorder %s135, %s138
      %p144 = scmp.eq.s32.totalorder %s13, 0
      %p145 = por %p143, %p144
      %p146 = scmp.ne.s32.totalorder %s135, %s138
      %p147 = scmp.eq.s32.totalorder %s18, 1
      %p148 = por %p146, %p147
      %p149 = scmp.ne.s32.totalorder %s138, %s139
      %p150 = scmp.eq.s32.totalorder %s18, 0
      %p151 = por %p149, %p150
      %p152 = scmp.ne.s32.totalorder %s138, %s139
      %p153 = scmp.eq.s32.totalorder %s19, 1
      %p154 = por %p152, %p153
      %p156 = scmp.ne.s32.totalorder %s139, %s155
      %p157 = scmp.eq.s32.totalorder %s19, 0
      %p158 = por %p156, %p157
      %p159 = scmp.le.s32.totalorder 1, %s13
      %p160 = scmp.lt.s32.totalorder %s13, 3
      %p161 = pnand %p159, %p160
      %p162 = pneg %p161
      // Predicated region
      $region9: #{tpu_custom_call.1} parent=5 // pred_check
        _
      $region10: #{tpu_custom_call.1} parent=5 // pred_check_branch
        %164 = sbr.rel (%p161) target = $region12
      $region11: #{tpu_custom_call.1} parent=5 // pred_region
        %s165 = ssub.s32 %s13, 1
        // Predicated region
        $region13: #{tpu_custom_call.1} parent=11 // pred_check
          %p166 = pneg %p102
        $region14: #{tpu_custom_call.1} parent=11 // pred_check_branch
          %168 = sbr.rel (%p166) target = $region16
        $region15: #{tpu_custom_call.1} parent=11 // pred_region
          _
        $region16: #{tpu_custom_call.1} parent=11 // pred_fallthru
          _
        // Predicated region
        $region17: #{tpu_custom_call.1} parent=11 // pred_check
          %p169 = pneg %p123
        $region18: #{tpu_custom_call.1} parent=11 // pred_check_branch
          %171 = sbr.rel (%p169) target = $region20
        $region19: #{tpu_custom_call.1} parent=11 // pred_region
          _
        $region20: #{tpu_custom_call.1} parent=11 // pred_fallthru
          _
      $region12: #{tpu_custom_call.1} parent=5 // pred_fallthru
        _
      %p172 = scmp.lt.s32.totalorder %s13, 2
      // Predicated region
      $region21: #{tpu_custom_call.1} parent=5 // pred_check
        %p173 = pneg %p172
      $region22: #{tpu_custom_call.1} parent=5 // pred_check_branch
        %175 = sbr.rel (%p173) target = $region24
      $region23: #{tpu_custom_call.1} parent=5 // pred_region
        // Predicated region
        $region25: #{tpu_custom_call.1} parent=23 // pred_check
          %p176 = pneg %p47
        $region26: #{tpu_custom_call.1} parent=23 // pred_check_branch
          %178 = sbr.rel (%p176) target = $region28
        $region27: #{tpu_custom_call.1} parent=23 // pred_region
          %p179 = scmp.lt.s32.totalorder %s20, 1
          %s180 = scalar_select %p179, %s20, 1
          %p181 = scmp.lt.s32.totalorder %s21, 0
          %s182 = scalar_select %p181, %s21, 0
          %s183 = sadd.s32 %s182, %s180
          %s184 = smul.addr %s183, 4
          %s185 = scalar_lea.vmem %s0, %s184
        $region28: #{tpu_custom_call.1} parent=23 // pred_fallthru
          _
        // Predicated region
        $region29: #{tpu_custom_call.1} parent=23 // pred_check
          %p186 = pneg %p75
        $region30: #{tpu_custom_call.1} parent=23 // pred_check_branch
          %188 = sbr.rel (%p186) target = $region32
        $region31: #{tpu_custom_call.1} parent=23 // pred_region
          %s189 = smul.u32 2, %s21
          %p190 = scmp.lt.s32.totalorder %s20, 1
          %s191 = scalar_select %p190, %s20, 1
          %p192 = scmp.lt.s32.totalorder %s189, 1
          %s193 = scalar_select %p192, %s189, 1
          %s194 = smul.addr %s191, 2
          %s195 = sadd.s32 %s193, %s194
          %s196 = smul.addr %s195, 8
          %s197 = scalar_lea.vmem %s1, %s196
          %s198 = smul.u32 2, %s21
        $region32: #{tpu_custom_call.1} parent=23 // pred_fallthru
          _
      $region24: #{tpu_custom_call.1} parent=5 // pred_fallthru
        _
      %p199 = scmp.le.s32.totalorder 1, %s13
      %p200 = scmp.lt.s32.totalorder %s13, 3
      %p201 = pnand %p199, %p200
      %p202 = pneg %p201
      // Predicated region
      $region33: #{tpu_custom_call.1} parent=5 // pred_check
        _
      $region34: #{tpu_custom_call.1} parent=5 // pred_check_branch
        %204 = sbr.rel (%p201) target = $region36
      $region35: #{tpu_custom_call.1} parent=5 // pred_region
        %s205 = ssub.s32 %s13, 1
        %p206 = scmp.lt.s32.totalorder %s22, 1
        %s207 = scalar_select %p206, %s22, 1
        %p208 = scmp.lt.s32.totalorder %s23, 0
        %s209 = scalar_select %p208, %s23, 0
        %s210 = sadd.s32 %s209, %s207
        %s211 = smul.addr %s210, 4
        %s212 = scalar_lea.vmem %s0, %s211
        %p213 = pneg %p53
        %p214 = pneg %p50
        %s215 = smul.u32 2, %s23
        %p216 = scmp.lt.s32.totalorder %s22, 1
        %s217 = scalar_select %p216, %s22, 1
        %p218 = scmp.lt.s32.totalorder %s215, 1
        %s219 = scalar_select %p218, %s215, 1
        %s220 = smul.addr %s217, 2
        %s221 = sadd.s32 %s219, %s220
        %s222 = smul.addr %s221, 8
        %s223 = scalar_lea.vmem %s1, %s222
        %p224 = pneg %p81
        %p225 = pneg %p78
        %p226 = pneg %p102
        %p227 = pneg %p99
        %p228 = pneg %p123
        %p229 = pneg %p120
        %p230 = pneg %p151
        %p231 = pneg %p148
        %s232 = sand.u32 %s138, 1
        %s233 = scalar_lea.sflag [#allocation3], %s232
        %s234 = sand.u32 %s138, 1
        %s235 = smul.addr %s234, 4
        %s236 = scalar_lea.vmem [#allocation2], %s235
        %p237 = scmp.lt.s32.totalorder %s22, 1
        %s238 = scalar_select %p237, %s22, 1
        %p239 = scmp.lt.s32.totalorder %s23, 0
        %s240 = scalar_select %p239, %s23, 0
        %s241 = sadd.s32 %s240, %s238
        %s242 = smul.addr %s241, 4
        %s243 = scalar_lea.vmem %s0, %s242
        %s244 = smul.u32 2, %s23
        %p245 = scmp.lt.s32.totalorder %s22, 1
        %s246 = scalar_select %p245, %s22, 1
        %p247 = scmp.lt.s32.totalorder %s244, 1
        %s248 = scalar_select %p247, %s244, 1
        %s249 = smul.addr %s246, 2
        %s250 = sadd.s32 %s248, %s249
        %s251 = smul.addr %s250, 8
        %s252 = scalar_lea.vmem %s1, %s251
        %s253 = smul.u32 2, %s23
        %v254 = vld [vmem:[%s252] sm:$0xff]
        %v255 = vld [vmem:[%s252 + $0x8] sm:$0xff]
        %v256 = vld [vmem:[%s2] sm:$0xf]
        %vm257 = vcmask 64512
        %v259 = vsel %vm257, %v256, 0
        %v262 = vsel %vm257, %v254, 0
        %v265 = vsel %vm257, %v255, 0
        %267 = vmatpush.xpose.msra.mxu0 0.0
        %268 = vmatpush.xpose.msra.mxu0 0.0
        %269 = vmatpush.xpose.msra.mxu0 0.0
        %270 = vmatpush.xpose.msra.mxu0 0.0
        %271 = vmatpush.xpose.msra.mxu0 0.0
        %272 = vmatpush.xpose.msra.mxu0 0.0
        %273 = vmatpush.xpose.msra.mxu0 0.0
        %274 = vmatpush.xpose.msra.mxu0 0.0
        %275 = vmatpush.xpose.msra.mxu0 0.0
        %276 = vmatpush.xpose.msra.mxu0 0.0
        %277 = vmatpush.xpose.msra.mxu0 0.0
        %278 = vmatpush.xpose.msra.mxu0 0.0
        %279 = vmatpush.xpose.msra.mxu0 0.0
        %280 = vmatpush.xpose.msra.mxu0 0.0
        %281 = vmatpush.xpose.msra.mxu0 %v265
        %282 = vmatpush.xpose.msra.mxu0 %v262
        %283 = vmatmul.f32.gmra.mxu0 %v259
        %v284 = vpop.f32.mrf.mxu0
        %v285 = vadd.f32 0.0, %v284
        %286 = vdwg.mxu0
        %s287 = smul.u32 %s23, 16
        %v288 = vlaneseq
        %v289 = vand.u32 %v288, 127
        %v290 = vstv %s287
        %v291 = vadd.s32 %v289, %v290
        %v292 = vld [vmem:[%s3] sm:$0xf]
        %vm293 = vcmp.ge.s32.totalorder %v291, 2
        %v294 = vsel %vm293, 1, 0
        %v295 = vcvt.s32.f32 %v294
        %297 = vset.pattern.permute.xlu0 0
        %298 = vperm.xlu0 %297, %v292
        %v299 = vpop.permute.xlu0 %298
        %v301 = vmul.f32 %v299, %v295
        %v302 = vld [vmem:[%s243] sm:$0xf]
        %v303 = vadd.f32 %v302, %v285
        %v304 = vadd.f32 %v303, %v301
        %vm305 = vcmask 125952
        %306 = vst.msk [vmem:[%s236] sm:$0xf] %vm305, %v304
        %s307 = sand.u32 %s138, 1
        %s308 = scalar_lea.sflag [#allocation3], %s307
        %s309 = sand.u32 %s138, 1
        %s310 = smul.addr %s309, 4
        %s311 = scalar_lea.vmem [#allocation2], %s310
        // Predicated region
        $region37: #{tpu_custom_call.1} parent=35 // pred_check
          %p312 = pneg %p148
        $region38: #{tpu_custom_call.1} parent=35 // pred_check_branch
          %314 = sbr.rel (%p312) target = $region40
        $region39: #{tpu_custom_call.1} parent=35 // pred_region
          %316 = vsyncadd %s308, 0
          %s317 = sadd.s32 %s23, %s22
          %s318 = smul.addr %s317, 4
          %s319 = scalar_lea.hbm %s4, %s318
          %s321 = sshll.u32 %s311, 4
          %s322 = int_to_ptr.vmem [resolvable:$true] %s321
          %s323 = sshll.u32 %s319, 4
          %s324 = int_to_ptr.hbm [resolvable:$true] %s323
          %326 = dma.vmem_to_hbm [thread:$0]  %s322, 64, %s324, %s308
        $region40: #{tpu_custom_call.1} parent=35 // pred_fallthru
          _
      $region36: #{tpu_custom_call.1} parent=5 // pred_fallthru
        _
      %p327 = scmp.le.s32.totalorder 2, %s13
      // Predicated region
      $region41: #{tpu_custom_call.1} parent=5 // pred_check
        %p328 = pneg %p327
      $region42: #{tpu_custom_call.1} parent=5 // pred_check_branch
        %330 = sbr.rel (%p328) target = $region44
      $region43: #{tpu_custom_call.1} parent=5 // pred_region
        %s331 = ssub.s32 %s13, 2
        // Predicated region
        $region45: #{tpu_custom_call.1} parent=43 // pred_check
          %p332 = pneg %p154
        $region46: #{tpu_custom_call.1} parent=43 // pred_check_branch
          %334 = sbr.rel (%p332) target = $region48
        $region47: #{tpu_custom_call.1} parent=43 // pred_region
          %s335 = sand.u32 %s139, 1
          %s336 = scalar_lea.sflag [#allocation3], %s335
          %s337 = sand.u32 %s139, 1
          %s338 = smul.addr %s337, 4
          %s339 = scalar_lea.vmem [#allocation2], %s338
          %341 = dma.done %s336, 64
        $region48: #{tpu_custom_call.1} parent=43 // pred_fallthru
          _
      $region44: #{tpu_custom_call.1} parent=5 // pred_fallthru
        _
    $region6: #{tpu_custom_call.1} parent=1 // loop_footer
      %s17 = sadd.s32 1, %s13
    $region7: #{tpu_custom_call.1} parent=1 // loop_footer_branch
      %12 = sbr.rel target = $region3
    $region8: #{tpu_custom_call.1} parent=1 // loop_exit
      _
    %342 = vsyncpa [#allocation3], 1
    %s343 = scalar_lea.sflag [#allocation3], 1
    %344 = vsyncpa %s343, 1

</llo_original>
